<compile_context>
chip_gen: v5e
topology: v5e:2x2
jax: 0.10.0
libtpu: 0.0.40
codegen_flags: <defaults>
</compile_context>

<pallas_src>
import jax
import jax.numpy as jnp
from jax import lax
from jax.experimental import pallas as pl
from jax.experimental.pallas import tpu as pltpu

_SUBLANE = 8


def _round_up(x, m):
    return ((x + m - 1) // m) * m


# ---------------------------------------------------------------------------
# forward():  `return self.prototypes`  (identity over the parameter — free)
# ---------------------------------------------------------------------------
def adapter_forward(prototypes):
    return prototypes


# ---------------------------------------------------------------------------
# zero_shot_constraint() with the 'l2' distance:
#   disimilitude = (prototypes - base_text_features)^2 . sum(-1)
#   return mean(alpha_constraint * disimilitude)
# ---------------------------------------------------------------------------
def _make_single_tile_kernel(inv_n):
    def kernel(proto_ref, base_ref, alpha_ref, out_ref):
        diff = proto_ref[...].astype(jnp.float32) - base_ref[...].astype(jnp.float32)
        rowsum = jnp.sum(diff * diff, axis=1, keepdims=True)          # (n, 1)
        out_ref[0, 0] = jnp.sum(alpha_ref[...] * rowsum) * inv_n
    return kernel


def _make_tiled_kernel(n, tn):
    def kernel(proto_ref, base_ref, alpha_ref, out_ref):
        i = pl.program_id(0)
        diff = proto_ref[...].astype(jnp.float32) - base_ref[...].astype(jnp.float32)
        rowsum = jnp.sum(diff * diff, axis=1, keepdims=True)          # (tn, 1)
        # alpha is resident (constant-index block); slice this tile's rows.
        start = pl.multiple_of(i * tn, _SUBLANE)
        a = alpha_ref[pl.ds(start, tn), :]                            # (tn, 1)
        # Mask rows >= n: the last (partial) input tile holds unspecified data
        # and 0 * NaN = NaN, so do not rely on alpha == 0 in padded rows.
        row_ids = i * tn + lax.broadcasted_iota(jnp.int32, (tn, 1), 0)
        contrib = jnp.where(row_ids < n, a * rowsum, 0.0)
        out_ref[0, 0] = jnp.sum(contrib)                              # per-tile partial
    return kernel


def zero_shot_constraint(prototypes, base_text_features, alpha_constraint, *,
                         tile_rows=None,
                         single_tile_max_bytes=12 * 1024 * 1024,
                         target_block_bytes=4 * 1024 * 1024):
    n, d = prototypes.shape
    assert base_text_features.shape == (n, d)
    ip = jnp.dtype(prototypes.dtype).itemsize
    ib = jnp.dtype(base_text_features.dtype).itemsize
    alpha2d = alpha_constraint.astype(jnp.float32).reshape(n, 1)

    input_bytes = n * d * (ip + ib)

    # ---------------- single-tile fast path (typical adapter sizes) ----------
    if tile_rows is None and input_bytes <= single_tile_max_bytes:
        vmem_limit = int(min(max(2 * input_bytes + n * 512 + (1 << 20),
                                 16 * 1024 * 1024), 48 * 1024 * 1024))
        cost = pl.CostEstimate(flops=3 * n * d + 2 * n, transcendentals=0,
                               bytes_accessed=input_bytes + n * 4 + 4)
        out = pl.pallas_call(
            _make_single_tile_kernel(1.0 / n),
            out_shape=jax.ShapeDtypeStruct((1, 1), jnp.float32),
            grid_spec=pltpu.PrefetchScalarGridSpec(
                num_scalar_prefetch=0,
                grid=(1,),
                in_specs=[
                    pl.BlockSpec((n, d), lambda i: (0, 0)),   # block == array, no padding
                    pl.BlockSpec((n, d), lambda i: (0, 0)),
                    pl.BlockSpec((n, 1), lambda i: (0, 0)),
                ],
                out_specs=pl.BlockSpec((1, 1), lambda i: (0, 0),
                                       memory_space=pltpu.SMEM),
            ),
            compiler_params=pltpu.CompilerParams(
                dimension_semantics=("arbitrary",),
                vmem_limit_bytes=vmem_limit,
            ),
            cost_estimate=cost,
        )(prototypes, base_text_features, alpha2d)
        return out[0, 0]

    # ---------------- tiled path (large n*d) ---------------------------------
    if tile_rows is None:
        tn = max(512, target_block_bytes // (d * max(ip, ib)))
    else:
        tn = tile_rows
    tn = _round_up(max(tn, _SUBLANE), _SUBLANE)
    tn = min(tn, _round_up(n, _SUBLANE))
    num_tiles = pl.cdiv(n, tn)
    n_a = num_tiles * tn

    # alpha is tiny: zero-pad to a whole number of tiles and load it once as a
    # resident constant-index VMEM block (no per-step alpha DMA).
    alpha_pad = jnp.zeros((n_a, 1), jnp.float32).at[:n, :].set(alpha2d)

    # double-buffered input blocks + resident alpha (+1 MiB headroom), <= 48 MiB
    block_bytes = 2 * tn * d * (ip + ib) + 2 * n_a * 512
    vmem_limit = int(min(max(block_bytes + (1 << 20), 16 * 1024 * 1024),
                         48 * 1024 * 1024))
    cost = pl.CostEstimate(flops=3 * n * d + 2 * n, transcendentals=0,
                           bytes_accessed=input_bytes + n_a * 4 + num_tiles * 4)

    partials = pl.pallas_call(
        _make_tiled_kernel(n, tn),
        out_shape=jax.ShapeDtypeStruct((num_tiles, 1), jnp.float32),
        grid_spec=pltpu.PrefetchScalarGridSpec(
            num_scalar_prefetch=0,
            grid=(num_tiles,),
            in_specs=[
                pl.BlockSpec((tn, d), lambda i: (i, 0)),      # last dim == d, no lane padding
                pl.BlockSpec((tn, d), lambda i: (i, 0)),
                pl.BlockSpec((n_a, 1), lambda i: (0, 0)),     # untiled alpha, loaded once
            ],
            out_specs=pl.BlockSpec((1, 1), lambda i: (i, 0),
                                   memory_space=pltpu.SMEM),
        ),
        compiler_params=pltpu.CompilerParams(
            # independent per-tile partials -> "parallel": both v7x TCs split the grid
            dimension_semantics=("parallel",),
            vmem_limit_bytes=vmem_limit,
        ),
        cost_estimate=cost,
    )(prototypes, base_text_features, alpha_pad)
    # Tiny final reduction + divide-by-true-n in the wrapper.
    return jnp.sum(partials) / n


# ---------------------------------------------------------------------------
# Module-equivalent container (init semantics of AdapterMethod with 'ZS' init)
# ---------------------------------------------------------------------------
class AdapterMethodPallas:
    def __init__(self, base_text_features, initialization="ZS"):
        self.initialization = initialization
        self.base_text_features = base_text_features   # kept in original dtype
        n = base_text_features.shape[0]
        self.alpha_constraint = jnp.zeros((n,), dtype=jnp.float32)
        if initialization == "RANDOM":
            # kaiming_normal_ equivalent (fan_in mode, gain sqrt(2))
            key = jax.random.PRNGKey(42)
            fan_in = base_text_features.shape[-1]
            std = (2.0 / fan_in) ** 0.5
            self.prototypes = (
                std * jax.random.normal(key, base_text_features.shape)
            ).astype(base_text_features.dtype)
        elif "ZS" in initialization or "CrossModal" in initialization:
            self.prototypes = jnp.array(base_text_features)  # clone
        elif "TR" in initialization:
            self.prototypes = jnp.zeros_like(base_text_features)
        else:
            # TODO(synk): ClipA / TipA variants add an MLP / cache keys that are
            # not exercised by forward(); forward() still only returns prototypes.
            self.prototypes = jnp.array(base_text_features)

    def forward(self):
        return adapter_forward(self.prototypes)

    def constraint(self):
        return zero_shot_constraint(
            self.prototypes, self.base_text_features, self.alpha_constraint
        )


if __name__ == "__main__":
    keys = jax.random.split(jax.random.PRNGKey(0), 9)
    (k_base, k_noise, k_alpha, k_b2, k_p2, k_a2, k_b3, k_p3, k_a3) = keys

    # Small deterministic shapes: num_classes=8, embed_dim=32
    num_classes, embed_dim = 8, 32
    base_text_features = jax.random.normal(
        k_base, (num_classes, embed_dim), dtype=jnp.float32)

    adapter = AdapterMethodPallas(base_text_features, initialization="ZS")

    # forward(): identity over prototypes (no kernel — free op per perf review)
    out = jax.block_until_ready(adapter.forward())
    assert out.shape == (num_classes, embed_dim)
    assert jnp.allclose(out, adapter.prototypes)

    # Constraint kernel, single-tile fast path.
    adapter.prototypes = base_text_features + 0.1 * jax.random.normal(
        k_noise, base_text_features.shape, dtype=jnp.float32)
    adapter.alpha_constraint = jax.random.uniform(
        k_alpha, (num_classes,), dtype=jnp.float32)

    got = jax.block_until_ready(adapter.constraint())
    diff = adapter.prototypes - base_text_features
    ref = jnp.mean(adapter.alpha_constraint * jnp.sum(diff * diff, axis=-1))
    assert jnp.allclose(got, ref, rtol=1e-5, atol=1e-6), (got, ref)

    # Non-aligned shape (n not %8, d not %128): fast path, block == array dims,
    # zero host-side padding.
    n2, d2 = 37, 200
    base2 = jax.random.normal(k_b2, (n2, d2), dtype=jnp.float32)
    proto2 = base2 + 0.05 * jax.random.normal(k_p2, (n2, d2), dtype=jnp.float32)
    alpha2 = jax.random.uniform(k_a2, (n2,), dtype=jnp.float32)
    got2 = jax.block_until_ready(zero_shot_constraint(proto2, base2, alpha2))
    ref2 = jnp.mean(alpha2 * jnp.sum((proto2 - base2) ** 2, axis=-1))
    assert jnp.allclose(got2, ref2, rtol=1e-5, atol=1e-6), (got2, ref2)

    # Forced tiled path: ragged last row tile exercises the in-kernel iota mask,
    # the resident-alpha slice, and the "parallel" per-tile-partial grid.
    n3, d3 = 200, 160
    base3 = jax.random.normal(k_b3, (n3, d3), dtype=jnp.float32)
    proto3 = base3 + 0.05 * jax.random.normal(k_p3, (n3, d3), dtype=jnp.float32)
    alpha3 = jax.random.uniform(k_a3, (n3,), dtype=jnp.float32)
    got3 = jax.block_until_ready(
        zero_shot_constraint(proto3, base3, alpha3, tile_rows=64))
    ref3 = jnp.mean(alpha3 * jnp.sum((proto3 - base3) ** 2, axis=-1))
    assert jnp.allclose(got3, ref3, rtol=1e-5, atol=1e-6), (got3, ref3)

    print("KERNEL_OK")
</pallas_src>

<mosaic_0001>
module attributes {stable_mosaic.version = 11 : i64} {
  func.func @kernel(%arg0: i32, %arg1: memref<8x32xf32, #tpu.memory_space<vmem>>, %arg2: memref<8x32xf32, #tpu.memory_space<vmem>>, %arg3: memref<8x1xf32, #tpu.memory_space<vmem>>, %arg4: memref<1x1xf32, #tpu.memory_space<smem>>) attributes {dimension_semantics = [#tpu.dimension_semantics<arbitrary>], iteration_bounds = array<i64: 1>, scalar_prefetch = 0 : i64, scratch_operands = 0 : i64, tpu.core_type = #tpu.core_type<tc>, window_params = [{pipeline_mode = #tpu.pipeline_mode<synchronous>, transform_indices = @transform_0, window_bounds = array<i64: 8, 32>}, {pipeline_mode = #tpu.pipeline_mode<synchronous>, transform_indices = @transform_1, window_bounds = array<i64: 8, 32>}, {pipeline_mode = #tpu.pipeline_mode<synchronous>, transform_indices = @transform_2, window_bounds = array<i64: 8, 1>}, {transform_indices = @transform_3, window_bounds = array<i64: 1, 1>}]} {
    %c0 = arith.constant 0 : index
    %c0_0 = arith.constant 0 : index
    %0 = vector.load %arg1[%c0, %c0_0] : memref<8x32xf32, #tpu.memory_space<vmem>>, vector<8x32xf32>
    %c0_1 = arith.constant 0 : index
    %c0_2 = arith.constant 0 : index
    %1 = vector.load %arg2[%c0_1, %c0_2] : memref<8x32xf32, #tpu.memory_space<vmem>>, vector<8x32xf32>
    %2 = arith.subf %0, %1 : vector<8x32xf32>
    %3 = arith.mulf %2, %2 : vector<8x32xf32>
    %cst = arith.constant dense<0.000000e+00> : vector<8xf32>
    %4 = vector.multi_reduction <add>, %3, %cst [1] : vector<8x32xf32> to vector<8xf32>
    %5 = vector.shape_cast %4 : vector<8xf32> to vector<8x1xf32>
    %c0_3 = arith.constant 0 : index
    %c0_4 = arith.constant 0 : index
    %6 = vector.load %arg3[%c0_3, %c0_4] : memref<8x1xf32, #tpu.memory_space<vmem>>, vector<8x1xf32>
    %7 = arith.mulf %6, %5 : vector<8x1xf32>
    %8 = vector.shape_cast %7 : vector<8x1xf32> to vector<1x8x1xf32>
    %cst_5 = arith.constant dense<0.000000e+00> : vector<1xf32>
    %9 = vector.multi_reduction <add>, %8, %cst_5 [1, 2] : vector<1x8x1xf32> to vector<1xf32>
    %10 = vector.shape_cast %9 : vector<1xf32> to vector<1x1x1xf32>
    %11 = vector.extract %10[0, 0, 0] : f32 from vector<1x1x1xf32>
    %cst_6 = arith.constant 1.250000e-01 : f32
    %12 = arith.mulf %11, %cst_6 : f32
    %c0_7 = arith.constant 0 : index
    %c0_8 = arith.constant 0 : index
    %13 = memref.load %arg4[%c0_7, %c0_8] : memref<1x1xf32, #tpu.memory_space<smem>>
    memref.store %12, %arg4[%c0_7, %c0_8] : memref<1x1xf32, #tpu.memory_space<smem>>
    return
  }
  func.func @transform_0(%arg0: i32) -> (i32, i32) {
    %c0_i32 = arith.constant 0 : i32
    %c0_i32_0 = arith.constant 0 : i32
    %c0_i32_1 = arith.constant 0 : i32
    return %c0_i32, %c0_i32_0 : i32, i32
  }
  func.func @transform_1(%arg0: i32) -> (i32, i32) {
    %c0_i32 = arith.constant 0 : i32
    %c0_i32_0 = arith.constant 0 : i32
    %c0_i32_1 = arith.constant 0 : i32
    return %c0_i32, %c0_i32_0 : i32, i32
  }
  func.func @transform_2(%arg0: i32) -> (i32, i32) {
    %c0_i32 = arith.constant 0 : i32
    %c0_i32_0 = arith.constant 0 : i32
    %c0_i32_1 = arith.constant 0 : i32
    return %c0_i32, %c0_i32_0 : i32, i32
  }
  func.func @transform_3(%arg0: i32) -> (i32, i32) {
    %c0_i32 = arith.constant 0 : i32
    %c0_i32_0 = arith.constant 0 : i32
    %c0_i32_1 = arith.constant 0 : i32
    return %c0_i32, %c0_i32_0 : i32, i32
  }
}

</mosaic_0001>

<llo_original>
// kernel: tpu_custom_call.1
$region0: #{tpu_custom_call.1}
  #allocation0 [shape = 'u32[]', space=smem, size = 0x4, offset = 0x4, fixed_abs, tag = 'smem constant byte address 0x4 - core index']
  #allocation1 [shape = 'u32[72,128]{1,0:T(1,128)}', space=vmem, size = 0x9000, scoped, tag = 'internal scratch']
  %s0 = inlined_call_operand.vmem [shape: f32[8,32], index: 0, kind: input, shape index: {}]
  %s1 = inlined_call_operand.hbm [shape: f32[8,32], index: 1, kind: input, shape index: {}]
  %s2 = inlined_call_operand.vmem [shape: f32[8,1], index: 2, kind: input, shape index: {}]
  %s3 = inlined_call_operand.hbm [shape: f32[1,1], index: 3, kind: output, shape index: {}]
  %s4 = sld [smem:[#allocation0]]
  $region26: #{tpu_custom_call.1} parent=0
    _
  %s6 = ssub.s32 1, %s4
  %s7 = scalar_select 0, %s6, %s4
  $region1: #{tpu_custom_call.1} parent=0
    #allocation2 [shape = 'u8[4096]{0}', space=vmem, size = 0x1000, scoped, tag = 'input window, operand 1, single buffered']
    #allocation3 [shape = 's32[1]{0}', space=sflag, size = 0x4, scoped, tag = 'scoped memory for tpu_custom_call.1']
    #allocation4 [shape = 's32[1]{0}', space=sflag, size = 0x4, scoped, tag = 'scoped memory for tpu_custom_call.1']
    #allocation5 [shape = 'u8[512]{0}', space=smem, size = 0x200, scoped, tag = 'output window, operand 0, single buffered']
    %8 = vsyncpa [#allocation3], 0
    %9 = vsyncpa [#allocation4], 0
    // Predicated region
    $region2: #{tpu_custom_call.1} parent=1 // pred_check
      _
    $region3: #{tpu_custom_call.1} parent=1 // pred_check_branch
      %11 = sbr.rel (0) target = $region5
    $region4: #{tpu_custom_call.1} parent=1 // pred_region
      _
    $region5: #{tpu_custom_call.1} parent=1 // pred_fallthru
      _
    // Predicated region
    $region6: #{tpu_custom_call.1} parent=1 // pred_check
      _
    $region7: #{tpu_custom_call.1} parent=1 // pred_check_branch
      %13 = sbr.rel (0) target = $region9
    $region8: #{tpu_custom_call.1} parent=1 // pred_region
      %15 = vsyncadd [#allocation3], 0
      %s17 = sshll.u32 %s1, 4
      %s18 = int_to_ptr.hbm [resolvable:$true] %s17
      %s19 = sshll.u32 [#allocation2], 4
      %s20 = int_to_ptr.vmem [resolvable:$true] %s19
      %22 = dma.hbm_to_vmem [thread:$0]  %s18, 128, %s20, [#allocation3]
    $region9: #{tpu_custom_call.1} parent=1 // pred_fallthru
      _
    // Predicated region
    $region10: #{tpu_custom_call.1} parent=1 // pred_check
      _
    $region11: #{tpu_custom_call.1} parent=1 // pred_check_branch
      %24 = sbr.rel (0) target = $region13
    $region12: #{tpu_custom_call.1} parent=1 // pred_region
      _
    $region13: #{tpu_custom_call.1} parent=1 // pred_fallthru
      _
    // Predicated region
    $region14: #{tpu_custom_call.1} parent=1 // pred_check
      _
    $region15: #{tpu_custom_call.1} parent=1 // pred_check_branch
      %26 = sbr.rel (0) target = $region17
    $region16: #{tpu_custom_call.1} parent=1 // pred_region
      %28 = dma.done [#allocation3], 128
    $region17: #{tpu_custom_call.1} parent=1 // pred_fallthru
      _
    %v29 = vld [vmem:[%s0] sm:$0xff]
    %v30 = vld [vmem:[#allocation2] sm:$0xff]
    %v31 = vsub.f32 %v29, %v30
    %v32 = vmul.f32 %v31, %v31
    %vm33 = vcmask 261120
    %v34 = vsel %vm33, %v32, 0.0
    %35 = vadd.xlane.f32.xlu0 %v34
    %v36 = vpop.xlane.xlu0 %35
    %v37 = vld [vmem:[%s2] sm:$0xff]
    %v38 = vmul.f32 %v37, %v36
    %vm39 = vcmask 7168
    %v40 = vsel %vm39, %v38, 0.0
    %41 = vadd.xlane.f32.xlu0 %v40
    %v42 = vpop.xlane.xlu0 %41
    %v43 = vrot.slane %v42, 4
    %v44 = vadd.f32 %v42, %v43
    %v45 = vrot.slane %v44, 2
    %v46 = vadd.f32 %v44, %v45
    %v47 = vrot.slane %v46, 1
    %v48 = vadd.f32 %v46, %v47
    %s49 = vtos %v48
    %s50 = smul.f32 %s49, 0.125
    %s51 = scalar_lea.smem [#allocation5], 0
    %52 = sst [smem:[%s51]] %s50
    // Predicated region
    $region18: #{tpu_custom_call.1} parent=1 // pred_check
      _
    $region19: #{tpu_custom_call.1} parent=1 // pred_check_branch
      %54 = sbr.rel (0) target = $region21
    $region20: #{tpu_custom_call.1} parent=1 // pred_region
      %56 = vsyncadd [#allocation4], 0
      %s58 = sshll.u32 %s3, 4
      %s59 = int_to_ptr.hbm [resolvable:$true] %s58
      %61 = dma.smem_to_hbm [#allocation5], 16, %s59, [#allocation4]
    $region21: #{tpu_custom_call.1} parent=1 // pred_fallthru
      _
    // Predicated region
    $region22: #{tpu_custom_call.1} parent=1 // pred_check
      _
    $region23: #{tpu_custom_call.1} parent=1 // pred_check_branch
      %63 = sbr.rel (0) target = $region25
    $region24: #{tpu_custom_call.1} parent=1 // pred_region
      %65 = dma.done [#allocation4], 16
    $region25: #{tpu_custom_call.1} parent=1 // pred_fallthru
      _
    %66 = sfence
    %67 = vsyncpa [#allocation3], 1
    %68 = vsyncpa [#allocation4], 1

</llo_original>
